<compile_context>
chip_gen: v7x
topology: tpu7x:2x2x1
jax: 0.10.0
libtpu: 0.0.40
codegen_flags: <defaults>
</compile_context>

<pallas_src>
import math
import functools

import jax
import jax.numpy as jnp
from jax.experimental import pallas as pl
from jax.experimental.pallas import tpu as pltpu


def _sinusoidal_kernel(x_ref, sf_ref, bias_ref, o_ref, *, use_matmul):
    """x_ref: (TM, R) grouped inputs; sf_ref: (R, LANE) factor-scatter matrix
    (or (1, LANE) factor row when use_matmul=False); bias_ref: (1, LANE) with 0
    on sin lanes and pi/2 on cos lanes; o_ref: (TM, LANE)."""
    if use_matmul:
        # Lane replication + factor multiply fused into one MXU matmul.
        phase = jnp.dot(x_ref[...], sf_ref[...], preferred_element_type=jnp.float32)
    else:
        # R == 1: a plain (TM, 1) * (1, LANE) VPU broadcast multiply suffices.
        phase = x_ref[...] * sf_ref[...]
    # cos(t) = sin(t + pi/2): one sin per element instead of sin + cos + select.
    o_ref[...] = jnp.sin(phase + bias_ref[...]).astype(o_ref.dtype)


def sinusoidal_embedding(x, factors, *, out_dtype=jnp.float32, tile_rows=None,
                         vmem_budget_bytes=40 * 1024 * 1024, max_lane=2048):
    """x: (N, 1) float32, factors: (1, dim_out // 2) float32 -> (N, dim_out)
    laid out as concat([sin(x * f), cos(x * f)], axis=1)."""
    if x.ndim != 2 or x.shape[1] != 1:
        raise ValueError("Got invalid shape %s, input should be (-1, 1)" % str(x.shape))
    assert factors.ndim == 2 and factors.shape[0] == 1
    x = x.astype(jnp.float32)
    factors = factors.astype(jnp.float32)

    n = x.shape[0]
    half = factors.shape[1]
    dim_out = 2 * half

    # Lane-dense grouping: every output row is a whole number of 128-lane vregs.
    lane = dim_out * 128 // math.gcd(dim_out, 128)
    if lane > max_lane:
        # TODO(synk): lane-masked store fallback for very awkward dim_out values;
        # pack to a larger LCM if such shapes ever matter for performance.
        lane = dim_out
    r_group = lane // dim_out

    m = pl.cdiv(n, r_group)
    n_pad = m * r_group
    x_p = x if n_pad == n else jnp.pad(x, ((0, n_pad - n), (0, 0)))
    x_g = x_p.reshape(m, r_group)                       # free row-major regrouping

    # Per-lane constants (tiny, stay resident in VMEM across the whole grid).
    lane_idx = jnp.arange(lane)
    col = lane_idx % dim_out                            # position within one embedding
    grp = lane_idx // dim_out                           # which grouped input column
    f_pattern = jnp.concatenate([factors[0], factors[0]])[col]              # (lane,)
    bias = jnp.where(col < half, 0.0, jnp.float32(math.pi / 2.0))
    bias = bias.reshape(1, lane).astype(jnp.float32)

    use_matmul = r_group > 1
    if use_matmul:
        # S_f[r, l] = f_pattern[l] if l // dim_out == r else 0.
        sf = jnp.where(grp[None, :] == jnp.arange(r_group)[:, None],
                       f_pattern[None, :], 0.0).astype(jnp.float32)         # (R, lane)
    else:
        sf = f_pattern.reshape(1, lane).astype(jnp.float32)

    # Tile sizing: double-buffered output tile + double-buffered input tile.
    # The (tile_m, r_group) input block pads its lane dim to 128 in VMEM, so it
    # costs tile_m * 512 B per buffer regardless of how narrow r_group is.
    out_row_bytes = lane * jnp.dtype(out_dtype).itemsize
    in_row_bytes = 4 * 128 * pl.cdiv(r_group, 128)      # lane-padded f32 input row
    per_row = 2 * (out_row_bytes + in_row_bytes)
    tile_m = (vmem_budget_bytes // per_row) if tile_rows is None else tile_rows
    tile_m = max(16, (tile_m // 16) * 16)               # multiple of 16: ok for f32 & bf16
    if tile_m >= m:
        tile_m = m                                      # full-extent block is always legal
    grid = (pl.cdiv(m, tile_m),)

    kernel = functools.partial(_sinusoidal_kernel, use_matmul=use_matmul)
    out_g = pl.pallas_call(
        kernel,
        out_shape=jax.ShapeDtypeStruct((m, lane), out_dtype),
        grid=grid,
        in_specs=[
            pl.BlockSpec((tile_m, r_group), lambda i: (i, 0)),
            pl.BlockSpec((sf.shape[0], lane), lambda i: (0, 0)),   # tiny, resident
            pl.BlockSpec((1, lane), lambda i: (0, 0)),             # tiny, resident
        ],
        out_specs=pl.BlockSpec((tile_m, lane), lambda i: (i, 0)),
        compiler_params=pltpu.CompilerParams(
            # TODO(synk): on v7x confirm both TCs are active under "parallel";
            # if not, switch this axis to pltpu.CORE_PARALLEL.
            dimension_semantics=("parallel",),
            vmem_limit_bytes=48 * 1024 * 1024,
        ),
    )(x_g, sf, bias)

    out = out_g.reshape(n_pad, dim_out)                 # free row-major view back
    if n_pad != n:
        # NOTE: this slice materializes an extra HBM copy of the whole output;
        # prefer callers with N % r_group == 0 (r_group = 128 / dim_out typically).
        out = out[:n]
    return out


def make_factors(dim_out=32, max_freq=1000.0, min_freq=1.0):
    if dim_out % 2 != 0:
        raise ValueError("dim_out should be divisible by 2")
    half = dim_out // 2
    freqs = jnp.exp(jnp.linspace(math.log(min_freq), math.log(max_freq), half))
    factors = freqs * 2.0 * math.pi
    return factors.reshape(1, half).astype(jnp.float32)


def _reference(x, factors):
    phase = x * factors
    return jnp.concatenate([jnp.sin(phase), jnp.cos(phase)], axis=1)


if __name__ == "__main__":
    # Tolerance note: cos(t) is computed as sin(t + pi/2); for phases up to
    # ~2*pi*1000 the f32 rounding of (t + pi/2) contributes up to a few 1e-4 of
    # absolute deviation vs jnp.cos(t) -- the same order as the f32 phase
    # rounding already present in the reference itself.
    ATOL = 2e-3

    # 1) Small shape consistent with the module: batch of 8 scalars -> (8, 32).
    dim_out = 32
    n = 8
    key = jax.random.PRNGKey(0)
    x = jax.random.uniform(key, (n, 1), dtype=jnp.float32)
    factors = make_factors(dim_out=dim_out)
    out = jax.block_until_ready(sinusoidal_embedding(x, factors))
    ref = _reference(x, factors)
    assert out.shape == (n, dim_out)
    assert jnp.allclose(out, ref, atol=ATOL)

    # 2) Multi-tile case exercising the grid / pipelining path (timestep-like x).
    n2 = 2048
    x2 = jax.random.uniform(jax.random.PRNGKey(1), (n2, 1), dtype=jnp.float32)
    out2 = jax.block_until_ready(sinusoidal_embedding(x2, factors, tile_rows=128))
    ref2 = _reference(x2, factors)
    assert out2.shape == (n2, dim_out)
    assert jnp.allclose(out2, ref2, atol=ATOL)

    # 3) dim_out not dividing 128 (48): exercises the lcm(dim_out,128) packing.
    dim_out3 = 48
    n3 = 64
    factors3 = make_factors(dim_out=dim_out3)
    x3 = jax.random.uniform(jax.random.PRNGKey(2), (n3, 1), dtype=jnp.float32)
    out3 = jax.block_until_ready(sinusoidal_embedding(x3, factors3))
    ref3 = _reference(x3, factors3)
    assert out3.shape == (n3, dim_out3)
    assert jnp.allclose(out3, ref3, atol=ATOL)

    print("KERNEL_OK")
</pallas_src>

<mosaic_0001>
module attributes {stable_mosaic.version = 11 : i64} {
  func.func @_sinusoidal_kernel(%arg0: i32, %arg1: memref<2x4xf32, #tpu.memory_space<vmem>>, %arg2: memref<4x128xf32, #tpu.memory_space<vmem>>, %arg3: memref<1x128xf32, #tpu.memory_space<vmem>>, %arg4: memref<2x128xf32, #tpu.memory_space<vmem>>) attributes {dimension_semantics = [#tpu.dimension_semantics<parallel>], iteration_bounds = array<i64: 1>, scalar_prefetch = 0 : i64, scratch_operands = 0 : i64, tpu.core_type = #tpu.core_type<tc>, window_params = [{transform_indices = @transform_0, window_bounds = array<i64: 2, 4>}, {pipeline_mode = #tpu.pipeline_mode<synchronous>, transform_indices = @transform_1, window_bounds = array<i64: 4, 128>}, {pipeline_mode = #tpu.pipeline_mode<synchronous>, transform_indices = @transform_2, window_bounds = array<i64: 1, 128>}, {transform_indices = @transform_3, window_bounds = array<i64: 2, 128>}]} {
    %c0 = arith.constant 0 : index
    %c0_0 = arith.constant 0 : index
    %0 = vector.load %arg1[%c0, %c0_0] : memref<2x4xf32, #tpu.memory_space<vmem>>, vector<2x4xf32>
    %c0_1 = arith.constant 0 : index
    %c0_2 = arith.constant 0 : index
    %1 = vector.load %arg2[%c0_1, %c0_2] : memref<4x128xf32, #tpu.memory_space<vmem>>, vector<4x128xf32>
    %cst = arith.constant dense<0.000000e+00> : vector<2x128xf32>
    %2 = tpu.matmul %0, %1, %cst {dimension_numbers = #tpu.dot_dimension_numbers<[1], [0], [0], [1], [0, 0, 1, 1], [], []>} : vector<2x4xf32>, vector<4x128xf32>, vector<2x128xf32> -> vector<2x128xf32>
    %c0_3 = arith.constant 0 : index
    %c0_4 = arith.constant 0 : index
    %3 = vector.load %arg3[%c0_3, %c0_4] : memref<1x128xf32, #tpu.memory_space<vmem>>, vector<1x128xf32>
    %4 = vector.broadcast %3 : vector<1x128xf32> to vector<2x128xf32>
    %5 = arith.addf %2, %4 : vector<2x128xf32>
    %6 = math.sin %5 : vector<2x128xf32>
    %c0_5 = arith.constant 0 : index
    %c0_6 = arith.constant 0 : index
    %7 = vector.load %arg4[%c0_5, %c0_6] : memref<2x128xf32, #tpu.memory_space<vmem>>, vector<2x128xf32>
    tpu.vector_store %arg4[%c0_5, %c0_6], %6 {strides = array<i32>} : memref<2x128xf32, #tpu.memory_space<vmem>>, vector<2x128xf32>,
    return
  }
  func.func @transform_0(%arg0: i32) -> (i32, i32) {
    %c0_i32 = arith.constant 0 : i32
    %c0_i32_0 = arith.constant 0 : i32
    return %arg0, %c0_i32 : i32, i32
  }
  func.func @transform_1(%arg0: i32) -> (i32, i32) {
    %c0_i32 = arith.constant 0 : i32
    %c0_i32_0 = arith.constant 0 : i32
    %c0_i32_1 = arith.constant 0 : i32
    return %c0_i32, %c0_i32_0 : i32, i32
  }
  func.func @transform_2(%arg0: i32) -> (i32, i32) {
    %c0_i32 = arith.constant 0 : i32
    %c0_i32_0 = arith.constant 0 : i32
    %c0_i32_1 = arith.constant 0 : i32
    return %c0_i32, %c0_i32_0 : i32, i32
  }
  func.func @transform_3(%arg0: i32) -> (i32, i32) {
    %c0_i32 = arith.constant 0 : i32
    %c0_i32_0 = arith.constant 0 : i32
    return %arg0, %c0_i32 : i32, i32
  }
}

</mosaic_0001>

<llo_original>
// kernel: tpu_custom_call.1
$region0: #{tpu_custom_call.1}
  #allocation0 [shape = 'u32[]', space=smem, size = 0x4, offset = 0x4, fixed_abs, tag = 'smem constant byte address 0x4 - core index']
  #allocation1 [shape = 'u32[144,128]{1,0:T(1,128)}', space=vmem, size = 0x12000, scoped, tag = 'internal scratch']
  %s0 = inlined_call_operand.hbm [shape: f32[2,4], index: 0, kind: input, shape index: {}]
  %s1 = inlined_call_operand.hbm [shape: f32[4,128], index: 1, kind: input, shape index: {}]
  %s2 = inlined_call_operand.vmem [shape: f32[1,128], index: 2, kind: input, shape index: {}]
  %s3 = inlined_call_operand.hbm [shape: f32[2,128], index: 3, kind: output, shape index: {}]
  %s4 = sld [smem:[#allocation0]]
  $region30: #{tpu_custom_call.1} parent=0
    _
  %s6 = ssub.s32 1, %s4
  %s7 = scalar_select 0, %s6, %s4
  $region1: #{tpu_custom_call.1} parent=0
    #allocation2 [shape = 'u8[1024]{0}', space=vmem, size = 0x400, scoped, tag = 'input window, operand 0, single buffered']
    #allocation3 [shape = 's32[1]{0}', space=sflag, size = 0x4, scoped, tag = 'scoped memory for tpu_custom_call.1']
    #allocation4 [shape = 's32[1]{0}', space=sflag, size = 0x4, scoped, tag = 'scoped memory for tpu_custom_call.1']
    #allocation5 [shape = 'u8[2048]{0}', space=vmem, size = 0x800, scoped, tag = 'input window, operand 1, single buffered']
    #allocation6 [shape = 's32[1]{0}', space=sflag, size = 0x4, scoped, tag = 'scoped memory for tpu_custom_call.1']
    #allocation7 [shape = 'u8[1024]{0}', space=vmem, size = 0x400, scoped, tag = 'output window, operand 0, single buffered']
    %8 = vsyncpa [#allocation3], 0
    %9 = vsyncpa [#allocation6], 0
    %10 = vsyncpa [#allocation4], 0
    // Predicated region
    $region2: #{tpu_custom_call.1} parent=1 // pred_check
      _
    $region3: #{tpu_custom_call.1} parent=1 // pred_check_branch
      %12 = sbr.rel (0) target = $region5
    $region4: #{tpu_custom_call.1} parent=1 // pred_region
      %s14 = ssub.s32 32, 32
      %15 = vsyncadd [#allocation3], %s14
      %s17 = sshll.u32 [#allocation2], 4
      %s18 = int_to_ptr.vmem [resolvable:$true] %s17
      %20 = dma.hbm_to_vmem [thread:$0]  %s0, 32, %s18, [#allocation3]
    $region5: #{tpu_custom_call.1} parent=1 // pred_fallthru
      _
    // Predicated region
    $region6: #{tpu_custom_call.1} parent=1 // pred_check
      _
    $region7: #{tpu_custom_call.1} parent=1 // pred_check_branch
      %22 = sbr.rel (0) target = $region9
    $region8: #{tpu_custom_call.1} parent=1 // pred_region
      %s24 = ssub.s32 64, 64
      %25 = vsyncadd [#allocation6], %s24
      %s27 = sshll.u32 [#allocation5], 4
      %s28 = int_to_ptr.vmem [resolvable:$true] %s27
      %30 = dma.hbm_to_vmem [thread:$0]  %s1, 64, %s28, [#allocation6]
    $region9: #{tpu_custom_call.1} parent=1 // pred_fallthru
      _
    // Predicated region
    $region10: #{tpu_custom_call.1} parent=1 // pred_check
      _
    $region11: #{tpu_custom_call.1} parent=1 // pred_check_branch
      %32 = sbr.rel (0) target = $region13
    $region12: #{tpu_custom_call.1} parent=1 // pred_region
      _
    $region13: #{tpu_custom_call.1} parent=1 // pred_fallthru
      _
    // Predicated region
    $region14: #{tpu_custom_call.1} parent=1 // pred_check
      _
    $region15: #{tpu_custom_call.1} parent=1 // pred_check_branch
      %34 = sbr.rel (0) target = $region17
    $region16: #{tpu_custom_call.1} parent=1 // pred_region
      %35 = dma.done [#allocation3], 32
    $region17: #{tpu_custom_call.1} parent=1 // pred_fallthru
      _
    // Predicated region
    $region18: #{tpu_custom_call.1} parent=1 // pred_check
      _
    $region19: #{tpu_custom_call.1} parent=1 // pred_check_branch
      %37 = sbr.rel (0) target = $region21
    $region20: #{tpu_custom_call.1} parent=1 // pred_region
      %38 = dma.done [#allocation6], 64
    $region21: #{tpu_custom_call.1} parent=1 // pred_fallthru
      _
    %v39 = vld [vmem:[#allocation2] sm:$0x3]
    %v40 = vld [vmem:[#allocation5] sm:$0xf]
    %v41 = vld [vmem:[%s2] sm:$0x1]
    %v43 = vlaneseq
    %v44 = vshrl.u32 %v43, 7
    %v45 = vsub.s32 0, %v44
    %v46 = vrot.slane %v41, %v45
    %vm48 = vcmask 31744
    %v50 = vsel %vm48, %v39, 0
    %vm52 = vcmask 1043456
    %v54 = vsel %vm52, %v40, 0
    %56 = vmatprep.subr.mxu0 0.0
    %57 = vmatpush1.msra.mxu0 %v54
    %58 = vmatprep.subr.mxu0 0.0
    %59 = vmatpush1.msra.mxu0 0.0
    %60 = vmatprep.subr.mxu0 0.0
    %61 = vmatpush1.msra.mxu0 0.0
    %62 = vmatprep.subr.mxu0 0.0
    %63 = vmatpush1.msra.mxu0 0.0
    %64 = vmatprep.subr.mxu0 0.0
    %65 = vmatpush1.msra.mxu0 0.0
    %66 = vmatprep.subr.mxu0 0.0
    %67 = vmatpush1.msra.mxu0 0.0
    %68 = vmatprep.subr.mxu0 0.0
    %69 = vmatpush1.msra.mxu0 0.0
    %70 = vmatprep.subr.mxu0 0.0
    %71 = vmatpush1.msra.mxu0 0.0
    %72 = vmatprep.subr.mxu0 0.0
    %73 = vmatpush1.msra.mxu0 0.0
    %74 = vmatprep.subr.mxu0 0.0
    %75 = vmatpush1.msra.mxu0 0.0
    %76 = vmatprep.subr.mxu0 0.0
    %77 = vmatpush1.msra.mxu0 0.0
    %78 = vmatprep.subr.mxu0 0.0
    %79 = vmatpush1.msra.mxu0 0.0
    %80 = vmatprep.subr.mxu0 0.0
    %81 = vmatpush1.msra.mxu0 0.0
    %82 = vmatprep.subr.mxu0 0.0
    %83 = vmatpush1.msra.mxu0 0.0
    %84 = vmatprep.subr.mxu0 0.0
    %85 = vmatpush1.msra.mxu0 0.0
    %86 = vmatprep.subr.mxu0 0.0
    %87 = vmatpush1.msra.mxu0 0.0
    %88 = vmatprep.subr.mxu0 0.0
    %89 = vmatpush1.msra.mxu0 0.0
    %90 = vmatprep.subr.mxu0 0.0
    %91 = vmatpush1.msra.mxu0 0.0
    %92 = vmatprep.subr.mxu0 0.0
    %93 = vmatpush1.msra.mxu0 0.0
    %94 = vmatprep.subr.mxu0 0.0
    %95 = vmatpush1.msra.mxu0 0.0
    %96 = vmatprep.subr.mxu0 0.0
    %97 = vmatpush1.msra.mxu0 0.0
    %98 = vmatprep.subr.mxu0 0.0
    %99 = vmatpush1.msra.mxu0 0.0
    %100 = vmatprep.subr.mxu0 0.0
    %101 = vmatpush1.msra.mxu0 0.0
    %102 = vmatprep.subr.mxu0 0.0
    %103 = vmatpush1.msra.mxu0 0.0
    %104 = vmatprep.subr.mxu0 0.0
    %105 = vmatpush1.msra.mxu0 0.0
    %106 = vmatprep.subr.mxu0 0.0
    %107 = vmatpush1.msra.mxu0 0.0
    %108 = vmatprep.subr.mxu0 0.0
    %109 = vmatpush1.msra.mxu0 0.0
    %110 = vmatprep.subr.mxu0 0.0
    %111 = vmatpush1.msra.mxu0 0.0
    %112 = vmatprep.subr.mxu0 0.0
    %113 = vmatpush1.msra.mxu0 0.0
    %114 = vmatprep.subr.mxu0 0.0
    %115 = vmatpush1.msra.mxu0 0.0
    %116 = vmatprep.subr.mxu0 0.0
    %117 = vmatpush1.msra.mxu0 0.0
    %118 = vmatprep.subr.mxu0 0.0
    %119 = vmatpush1.msra.mxu0 0.0
    %120 = vmatprep.mubr.f32.mxu0 0.0
    %121 = vmatmul.mubr.f32.gmra.mrb[0].mxu0 %v50
    %v122 = vpop.f32.mrb[0].mxu0
    %v123 = vadd.f32 %v46, %v122
    %v124 = vpop.f32.mrb[0].mxu0
    %125 = vdwg.mxu0
    %v126 = vand.u32 2147483647, %v123
    %vm127 = vcmp.le.f32.partialorder %v126, 0.7853982
    %vm128 = vcmp.lt.s32.totalorder %v123, 0
    %v129 = vand.u32 %v123, 2139095040
    %v130 = vshrl.u32 %v129, 23
    %v131 = vsub.s32 %v130, 127
    %v132 = vand.u32 2147483647, %v123
    %v133 = vand.u32 %v132, 8388607
    %v134 = vor.u32 %v133, 8388608
    %v135 = vsub.s32 0, %v134
    %v136 = vadd.s32 %v131, 1
    %vm137 = vcmp.gt.s32.totalorder %v136, 0
    %v138 = vsel %vm137, %v136, 0
    %v139 = vshrl.u32 %v138, 5
    %v140 = vand.u32 %v138, 31
    %v141 = vsub.s32 32, %v140
    %v142 = vshrl.u32 683565275, %v141
    %v143 = vshll.u32 683565275, %v140
    %v144 = vshrl.u32 2475754826, %v141
    %v145 = vor.u32 %v143, %v144
    %v146 = vshll.u32 2475754826, %v140
    %v147 = vshrl.u32 2131351028, %v141
    %v148 = vor.u32 %v146, %v147
    %v149 = vshll.u32 2131351028, %v140
    %v150 = vshrl.u32 2102212464, %v141
    %v151 = vor.u32 %v149, %v150
    %v152 = vshll.u32 2102212464, %v140
    %v153 = vshrl.u32 920167782, %v141
    %v154 = vor.u32 %v152, %v153
    %v155 = vshll.u32 920167782, %v140
    %v156 = vshrl.u32 1326507024, %v141
    %v157 = vor.u32 %v155, %v156
    %vm158 = vcmp.lt.s32.totalorder %v139, 1
    %vm159 = vcmp.lt.s32.totalorder %v139, 2
    %vm160 = vcmp.lt.s32.totalorder %v139, 3
    %vm161 = vcmp.lt.s32.totalorder %v139, 4
    %v162 = vsel %vm158, %v142, %v145
    %v163 = vsel %vm161, %v151, 2102212464
    %v164 = vsel %vm160, %v148, %v163
    %v165 = vsel %vm159, %v162, %v164
    %v166 = vsel %vm158, %v145, %v148
    %v167 = vsel %vm161, %v154, 920167782
    %v168 = vsel %vm160, %v151, %v167
    %v169 = vsel %vm159, %v166, %v168
    %v170 = vsel %vm158, %v148, %v151
    %v171 = vsel %vm161, %v157, 1326507024
    %v172 = vsel %vm160, %v154, %v171
    %v173 = vsel %vm159, %v170, %v172
    %v174 = vshll.u32 %v134, 8
    %v175 = vmul.u32.u64.compose %v174, %v173
    %v176 = vextract.low.u32 %v175
    %v177 = vextract.high.u32 %v175
    %v178 = vmul.u32.u64.compose %v174, %v169
    %v179 = vextract.low.u32 %v178
    %v180 = vextract.high.u32 %v178
    %v181 = vmul.u32 %v174, %v165
    %v182 = vadd.s32 %v177, %v179
    %vm183 = vc.u32 %v177, %v179
    %v184 = vadd.s32 %v180, 1
    %v185 = vsel %vm183, %v184, %v180
    %v186 = vadd.s32 %v181, %v185
    %v187 = vadd.s32 %v186, 536870912
    %v188 = vshrl.u32 %v187, 30
    %v189 = vshll.u32 %v188, 30
    %v190 = vsub.s32 %v186, %v189
    %vm191 = vcmp.lt.s32.totalorder %v190, 0
    %v192 = vsub.s32 0, %v190
    %v193 = vsel %vm191, %v192, %v190
    %v194 = vclz %v193
    %v195 = vsub.s32 %v194, 2
    %vm196 = vcmp.gt.s32.totalorder 0, %v195
    %v197 = vsel %vm196, 0, %v195
    %v198 = vsub.s32 32, %v197
    %v199 = vshll.u32 %v190, %v197
    %v200 = vshrl.u32 %v182, %v198
    %v201 = vor.u32 %v199, %v200
    %v202 = vsub.s32 4294967266, %v197
    %v203 = vadd.s32 %v202, 127
    %v204 = vshll.u32 %v203, 23
    %v205 = vor.u32 4788187, %v204
    %v206 = vand.u32 2147483647, %v205
    %v208 = vcvt.s32.f32 %v201
    %v209 = vmul.f32 %v208, %v206
    %v210 = vxor.u32 %v209, 2147483648
    %v211 = vsel %vm128, %v210, %v209
    %v212 = vsub.s32 4, %v188
    %v213 = vsel %vm128, %v212, %v188
    %v214 = vsel %vm127, %v123, %v211
    %v215 = vsel %vm127, 0, %v213
    %v216 = vcosq.f32.pop %v214
    %v217 = vsinq.f32.pop %v214
    %vm218 = vweird.f32 %v123
    %v219 = vadd.s32 %v215, 3
    %v220 = vand.u32 %v219, 3
    %vm221 = vcmp.lt.s32.totalorder %v220, 2
    %vm222 = vcmp.eq.s32.totalorder %v220, 0
    %v223 = vxor.u32 %v217, 2147483648
    %v224 = vsel %vm222, %v216, %v223
    %vm225 = vcmp.eq.s32.totalorder %v220, 2
    %v226 = vxor.u32 %v216, 2147483648
    %v227 = vsel %vm225, %v226, %v217
    %v228 = vsel %vm221, %v224, %v227
    %v229 = vsel %vm218, nan, %v228
    %230 = vst [vmem:[#allocation7] sm:$0x3] %v229
    // Predicated region
    $region22: #{tpu_custom_call.1} parent=1 // pred_check
      _
    $region23: #{tpu_custom_call.1} parent=1 // pred_check_branch
      %232 = sbr.rel (0) target = $region25
    $region24: #{tpu_custom_call.1} parent=1 // pred_region
      %s234 = ssub.s32 32, 32
      %235 = vsyncadd [#allocation4], %s234
      %s237 = sshll.u32 [#allocation7], 4
      %s238 = int_to_ptr.vmem [resolvable:$true] %s237
      %240 = dma.vmem_to_hbm [thread:$0]  %s238, 32, %s3, [#allocation4]
    $region25: #{tpu_custom_call.1} parent=1 // pred_fallthru
      _
    // Predicated region
    $region26: #{tpu_custom_call.1} parent=1 // pred_check
      _
    $region27: #{tpu_custom_call.1} parent=1 // pred_check_branch
      %242 = sbr.rel (0) target = $region29
    $region28: #{tpu_custom_call.1} parent=1 // pred_region
      %243 = dma.done [#allocation4], 32
    $region29: #{tpu_custom_call.1} parent=1 // pred_fallthru
      _
    %244 = vsyncpa [#allocation3], 1
    %245 = vsyncpa [#allocation6], 1
    %246 = vsyncpa [#allocation4], 1

</llo_original>
